<compile_context>
chip_gen: v6e
topology: v6e:2x2x1
jax: 0.10.0
libtpu: 0.0.40
codegen_flags: <defaults>
</compile_context>

<pallas_src>
import warnings
import functools

import numpy as np
import jax
import jax.numpy as jnp
from jax import lax
from jax.experimental import pallas as pl
from jax.experimental.pallas import tpu as pltpu

_LANES = 128                 # lane width; top-k outputs are padded to this
_SIGN_FLIP = 0x7FFFFFFF      # monotone-int mapping helper for f32 bit patterns


# ----------------------------------------------------------------------------
# Pallas kernel: row-wise log-softmax + top-k (k = beamsize), lane-dense outputs
# ----------------------------------------------------------------------------
def _topk_kernel(x_ref, vals_ref, idx_ref, *, beamsize, vocab_size):
    # x_ref block: (Rt, V) rows of logits (one row = one (t, b) frame).
    x = x_ref[...].astype(jnp.float32)                        # (Rt, V)

    # log-softmax over the vocab (lane) axis -- kept in registers, never written back.
    m = jnp.max(x, axis=-1, keepdims=True)                    # (Rt, 1)   XLU
    ex = jnp.exp(x - m)                                       #           EUP
    lse = jnp.log(jnp.sum(ex, axis=-1, keepdims=True))        # (Rt, 1)   XLU + EUP
    logp = x - (m + lse)                                      # (Rt, V)

    # Pack (value, index) into one monotone int32 key so a single max reduction per
    # top-k step yields both the max value and its argmax.
    #   key order == logp order; low b bits hold (2^b-1 - lane) so smaller index wins ties.
    # Note: the low ceil(log2 V) mantissa bits of the reported value are clobbered
    # (error <= 2^ceil(log2 V) ulps of logp), which is fine for beam scores.
    flip = jnp.int32(_SIGN_FLIP)
    bits = pltpu.bitcast(logp, jnp.int32)                     # (Rt, V)
    key = jnp.where(bits < 0, bits ^ flip, bits)              # monotone int32 key
    b_bits = max(1, (vocab_size - 1).bit_length())
    low = (1 << b_bits) - 1
    low_mask = jnp.int32(low)
    hi_mask = jnp.int32(-(1 << b_bits))
    lane_iota = lax.broadcasted_iota(jnp.int32, logp.shape, 1)        # (Rt, V)
    key = (key & hi_mask) | (jnp.int32(low) - lane_iota)

    rows = x.shape[0]
    out_iota = lax.broadcasted_iota(jnp.int32, (rows, _LANES), 1)     # (Rt, 128)
    out_keys = jnp.zeros((rows, _LANES), jnp.int32)
    neg = jnp.int32(-(2 ** 31))

    for j in range(beamsize):                                 # small static unroll
        kmax = jnp.max(key, axis=-1, keepdims=True)           # ONE XLU reduction per step
        out_keys = jnp.where(out_iota == j, kmax, out_keys)   # in-register accumulate
        sel = jnp.int32(low) - (kmax & low_mask)              # argmax lane (exact)
        key = jnp.where(lane_iota == sel, neg, key)           # mask the winner lane

    # Decode once, store once (lane-dense, unmasked 128-wide stores).
    out_idx = jnp.int32(low) - (out_keys & low_mask)
    vbits = jnp.where(out_keys < 0, out_keys ^ flip, out_keys)
    vals_ref[...] = pltpu.bitcast(vbits, jnp.float32)
    idx_ref[...] = out_idx


def frame_logsoftmax_topk(predicts, beamsize):
    """predicts: (T, B, V) logits -> (vals (T,B,K) f32 log-probs, idx (T,B,K) i32)."""
    T, B, V = predicts.shape
    if beamsize > V:
        raise ValueError(f"beamsize ({beamsize}) must be <= vocab size ({V})")
    if beamsize > _LANES:
        raise ValueError(f"beamsize ({beamsize}) must be <= {_LANES}")

    R = T * B
    x = predicts.reshape(R, V)
    itemsize = jnp.dtype(x.dtype).itemsize

    # Block sizing: ~4 MiB input block (double-buffered stays well inside the scoped
    # VMEM budget on v5e/v6e/v7x); rows must be a multiple of 8 (sublane tiling).
    target_block_bytes = 4 * 1024 * 1024
    rt = (target_block_bytes // (V * itemsize)) // 8 * 8
    rt = int(max(8, min(1024, rt)))
    r8 = ((R + 7) // 8) * 8
    rt = min(rt, r8)
    r_pad = ((R + rt - 1) // rt) * rt
    if r_pad != R:
        x = jnp.pad(x, ((0, r_pad - R), (0, 0)))              # zero rows -> finite logp

    kernel = functools.partial(_topk_kernel, beamsize=beamsize, vocab_size=V)
    cost = pl.CostEstimate(
        flops=int(r_pad * V * (4 + 3 * beamsize)),
        transcendentals=int(r_pad * V),
        bytes_accessed=int(r_pad * V * itemsize + 2 * r_pad * _LANES * 4),
    )

    vals_p, idx_p = pl.pallas_call(
        kernel,
        out_shape=(
            jax.ShapeDtypeStruct((r_pad, _LANES), jnp.float32),
            jax.ShapeDtypeStruct((r_pad, _LANES), jnp.int32),
        ),
        grid=(r_pad // rt,),
        in_specs=[pl.BlockSpec((rt, V), lambda i: (i, 0))],
        out_specs=(
            pl.BlockSpec((rt, _LANES), lambda i: (i, 0)),
            pl.BlockSpec((rt, _LANES), lambda i: (i, 0)),
        ),
        compiler_params=pltpu.CompilerParams(
            dimension_semantics=("parallel",),               # shards across v7x's 2 TCs
            vmem_limit_bytes=32 * 1024 * 1024,
        ),
        cost_estimate=cost,
    )(x)

    vals = vals_p[:R, :beamsize].reshape(T, B, beamsize)
    idx = idx_p[:R, :beamsize].reshape(T, B, beamsize)
    return vals, idx


# ----------------------------------------------------------------------------
# Beam recombination: lax.scan with backpointers (tiny shapes, plain JAX glue)
# ----------------------------------------------------------------------------
def beam_search(topk_vals, topk_idx):
    """Vanilla beam search over per-frame top-k candidates.

    topk_vals/topk_idx: (T, B, K).  Returns (scores (B,K), seqs (B,K,T)).
    # TODO(synk): proper CTC *prefix* beam search merges hypotheses that collapse to
    # the same string (per-prefix blank/repeat bookkeeping); that dynamic dict/merge
    # step has no clean Pallas/JAX equivalent and is omitted here.
    """
    T, B, K = topk_vals.shape

    def fwd_step(scores, frame):
        vals_t, idx_t = frame                                  # (B, K) each
        cand = scores[:, :, None] + vals_t[:, None, :]         # (B, K, K)
        new_scores, flat = lax.top_k(cand.reshape(B, K * K), K)
        parent = flat // K                                     # beam slot at t-1
        tok_sel = flat % K
        tok = jnp.take_along_axis(idx_t, tok_sel, axis=1)      # token emitted at t
        return new_scores, (parent, tok)

    init_scores = topk_vals[0]                                 # (B, K)
    final_scores, (parents, toks) = lax.scan(
        fwd_step, init_scores, (topk_vals[1:], topk_idx[1:]))  # (T-1, B, K) each

    # Backtrack through the backpointers (reverse scan, outputs in forward order).
    def back_step(beam_ptr, pt):
        parent, tok = pt                                       # (B, K)
        token = jnp.take_along_axis(tok, beam_ptr, axis=1)
        beam_ptr = jnp.take_along_axis(parent, beam_ptr, axis=1)
        return beam_ptr, token

    init_ptr = jnp.broadcast_to(jnp.arange(K, dtype=jnp.int32)[None, :], (B, K))
    final_ptr, toks_fwd = lax.scan(back_step, init_ptr, (parents, toks), reverse=True)
    first_tok = jnp.take_along_axis(topk_idx[0], final_ptr, axis=1)    # (B, K)
    seqs = jnp.concatenate([first_tok[None], toks_fwd], axis=0)        # (T, B, K)
    return final_scores, jnp.transpose(seqs, (1, 2, 0))                # (B, K, T)


@functools.partial(jax.jit, static_argnames=("beamsize",))
def _decode(predicts, *, beamsize):
    vals, idx = frame_logsoftmax_topk(predicts, beamsize)
    scores, seqs = beam_search(vals, idx)
    return scores, seqs, vals, idx


def ctc_collapse(tokens, blank_idx):
    """Host-side CTC collapse (remove repeats, then blanks) of a 1-D token array."""
    tokens = np.asarray(tokens)
    out = []
    prev = None
    for t in tokens.tolist():
        if t != prev and t != blank_idx:
            out.append(t)
        prev = t
    return out


# ----------------------------------------------------------------------------
# Module-equivalent wrapper
# ----------------------------------------------------------------------------
class CTCBeamsearchDecoderPallas:
    """JAX/Pallas analogue of ocrstack CTCBeamsearchDecoder."""

    def __init__(self, blank_idx: int, beamsize: int):
        self.blank_idx = blank_idx
        self.beamsize = beamsize

    def __call__(self, predicts):
        if self.beamsize == 1:
            warnings.warn('If beamsize is set to 1, it is prefered to use '
                          'ctc_greedy_decoder because it is faster.')
        scores, seqs, vals, idx = _decode(predicts, beamsize=self.beamsize)
        # TODO(synk): mapping token ids -> characters requires the CTCVocab object
        # (host-side lookup); we return collapsed token-id sequences instead.
        best_seqs = [ctc_collapse(np.asarray(seqs)[b, 0], self.blank_idx)
                     for b in range(seqs.shape[0])]
        return best_seqs, scores, vals, idx


# ----------------------------------------------------------------------------
if __name__ == "__main__":
    T, B, V = 8, 2, 32          # time, batch, vocab (blank = index 0)
    beamsize = 4

    key = jax.random.PRNGKey(0)
    predicts = jax.random.normal(key, (T, B, V), dtype=jnp.float32)

    decoder = CTCBeamsearchDecoderPallas(blank_idx=0, beamsize=beamsize)
    best_seqs, scores, vals, idx = decoder(predicts)
    jax.block_until_ready((scores, vals, idx))

    # sanity check against pure-JAX reference
    ref_logp = jax.nn.log_softmax(predicts, axis=-1)
    ref_vals, _ = lax.top_k(ref_logp, beamsize)

    # Packed-key argmax clobbers the low ceil(log2(V)) mantissa bits of the reported
    # scores (<= ~2e-5 absolute here), so compare with a slightly loose tolerance.
    assert np.allclose(np.asarray(vals), np.asarray(ref_vals), atol=1e-4, rtol=1e-4)

    # Validate indices: the reference log-prob gathered at our indices must match our values.
    gathered = jnp.take_along_axis(ref_logp, idx, axis=-1)
    assert np.allclose(np.asarray(vals), np.asarray(gathered), atol=1e-4, rtol=1e-4)
    assert int(jnp.min(idx)) >= 0 and int(jnp.max(idx)) < V

    print("KERNEL_OK")
</pallas_src>

<mosaic_0001>
module attributes {stable_mosaic.version = 11 : i64} {
  func.func @_topk_kernel(%arg0: i32, %arg1: memref<16x32xf32, #tpu.memory_space<vmem>>, %arg2: memref<16x128xf32, #tpu.memory_space<vmem>>, %arg3: memref<16x128xi32, #tpu.memory_space<vmem>>) attributes {dimension_semantics = [#tpu.dimension_semantics<parallel>], iteration_bounds = array<i64: 1>, scalar_prefetch = 0 : i64, scratch_operands = 0 : i64, tpu.core_type = #tpu.core_type<tc>, window_params = [{transform_indices = @transform_0, window_bounds = array<i64: 16, 32>}, {transform_indices = @transform_1, window_bounds = array<i64: 16, 128>}, {transform_indices = @transform_2, window_bounds = array<i64: 16, 128>}]} {
    %c0 = arith.constant 0 : index
    %c0_0 = arith.constant 0 : index
    %0 = vector.load %arg1[%c0, %c0_0] : memref<16x32xf32, #tpu.memory_space<vmem>>, vector<16x32xf32>
    %cst = arith.constant dense<0xFF800000> : vector<16xf32>
    %1 = vector.multi_reduction <maximumf>, %0, %cst [1] : vector<16x32xf32> to vector<16xf32>
    %2 = vector.shape_cast %1 : vector<16xf32> to vector<16x1xf32>
    %3 = vector.broadcast %2 : vector<16x1xf32> to vector<16x32xf32>
    %4 = arith.subf %0, %3 : vector<16x32xf32>
    %5 = math.exp %4 : vector<16x32xf32>
    %cst_1 = arith.constant dense<0.000000e+00> : vector<16xf32>
    %6 = vector.multi_reduction <add>, %5, %cst_1 [1] : vector<16x32xf32> to vector<16xf32>
    %7 = vector.shape_cast %6 : vector<16xf32> to vector<16x1xf32>
    %8 = math.log %7 : vector<16x1xf32>
    %9 = arith.addf %2, %8 : vector<16x1xf32>
    %10 = vector.broadcast %9 : vector<16x1xf32> to vector<16x32xf32>
    %11 = arith.subf %0, %10 : vector<16x32xf32>
    %12 = tpu.bitcast %11 : vector<16x32xf32> -> vector<16x32xi32>
    %c0_i32 = arith.constant 0 : i32
    %13 = vector.broadcast %c0_i32 : i32 to vector<16x32xi32>
    %14 = arith.cmpi slt, %12, %13 : vector<16x32xi32>
    %c2147483647_i32 = arith.constant 2147483647 : i32
    %15 = vector.broadcast %c2147483647_i32 : i32 to vector<16x32xi32>
    %16 = arith.xori %12, %15 : vector<16x32xi32>
    %17 = arith.select %14, %16, %12 : vector<16x32xi1>, vector<16x32xi32>
    %18 = tpu.iota {dimensions = array<i32: 1>} : vector<16x32xi32>
    %c-32_i32 = arith.constant -32 : i32
    %19 = vector.broadcast %c-32_i32 : i32 to vector<16x32xi32>
    %20 = arith.andi %17, %19 : vector<16x32xi32>
    %c31_i32 = arith.constant 31 : i32
    %21 = vector.broadcast %c31_i32 : i32 to vector<16x32xi32>
    %22 = arith.subi %21, %18 : vector<16x32xi32>
    %23 = arith.ori %20, %22 : vector<16x32xi32>
    %24 = tpu.iota {dimensions = array<i32: 1>} : vector<16x128xi32>
    %c0_i32_2 = arith.constant 0 : i32
    %25 = vector.broadcast %c0_i32_2 : i32 to vector<16x128xi32>
    %cst_3 = arith.constant dense<-2147483648> : vector<16xi32>
    %26 = vector.multi_reduction <maxsi>, %23, %cst_3 [1] : vector<16x32xi32> to vector<16xi32>
    %27 = vector.shape_cast %26 : vector<16xi32> to vector<16x1xi32>
    %c0_i32_4 = arith.constant 0 : i32
    %28 = vector.broadcast %c0_i32_4 : i32 to vector<16x128xi32>
    %29 = arith.cmpi eq, %24, %28 : vector<16x128xi32>
    %30 = vector.shape_cast %27 : vector<16x1xi32> to vector<16x1xi32>
    %31 = vector.broadcast %30 : vector<16x1xi32> to vector<16x128xi32>
    %32 = arith.select %29, %31, %25 : vector<16x128xi1>, vector<16x128xi32>
    %c31_i32_5 = arith.constant 31 : i32
    %33 = vector.broadcast %c31_i32_5 : i32 to vector<16x1xi32>
    %34 = arith.andi %27, %33 : vector<16x1xi32>
    %c31_i32_6 = arith.constant 31 : i32
    %35 = vector.broadcast %c31_i32_6 : i32 to vector<16x1xi32>
    %36 = arith.subi %35, %34 : vector<16x1xi32>
    %37 = vector.broadcast %36 : vector<16x1xi32> to vector<16x32xi32>
    %38 = arith.cmpi eq, %18, %37 : vector<16x32xi32>
    %c-2147483648_i32 = arith.constant -2147483648 : i32
    %39 = vector.broadcast %c-2147483648_i32 : i32 to vector<16x32xi32>
    %40 = arith.select %38, %39, %23 : vector<16x32xi1>, vector<16x32xi32>
    %cst_7 = arith.constant dense<-2147483648> : vector<16xi32>
    %41 = vector.multi_reduction <maxsi>, %40, %cst_7 [1] : vector<16x32xi32> to vector<16xi32>
    %42 = vector.shape_cast %41 : vector<16xi32> to vector<16x1xi32>
    %c1_i32 = arith.constant 1 : i32
    %43 = vector.broadcast %c1_i32 : i32 to vector<16x128xi32>
    %44 = arith.cmpi eq, %24, %43 : vector<16x128xi32>
    %45 = vector.shape_cast %42 : vector<16x1xi32> to vector<16x1xi32>
    %46 = vector.broadcast %45 : vector<16x1xi32> to vector<16x128xi32>
    %47 = arith.select %44, %46, %32 : vector<16x128xi1>, vector<16x128xi32>
    %c31_i32_8 = arith.constant 31 : i32
    %48 = vector.broadcast %c31_i32_8 : i32 to vector<16x1xi32>
    %49 = arith.andi %42, %48 : vector<16x1xi32>
    %c31_i32_9 = arith.constant 31 : i32
    %50 = vector.broadcast %c31_i32_9 : i32 to vector<16x1xi32>
    %51 = arith.subi %50, %49 : vector<16x1xi32>
    %52 = vector.broadcast %51 : vector<16x1xi32> to vector<16x32xi32>
    %53 = arith.cmpi eq, %18, %52 : vector<16x32xi32>
    %c-2147483648_i32_10 = arith.constant -2147483648 : i32
    %54 = vector.broadcast %c-2147483648_i32_10 : i32 to vector<16x32xi32>
    %55 = arith.select %53, %54, %40 : vector<16x32xi1>, vector<16x32xi32>
    %cst_11 = arith.constant dense<-2147483648> : vector<16xi32>
    %56 = vector.multi_reduction <maxsi>, %55, %cst_11 [1] : vector<16x32xi32> to vector<16xi32>
    %57 = vector.shape_cast %56 : vector<16xi32> to vector<16x1xi32>
    %c2_i32 = arith.constant 2 : i32
    %58 = vector.broadcast %c2_i32 : i32 to vector<16x128xi32>
    %59 = arith.cmpi eq, %24, %58 : vector<16x128xi32>
    %60 = vector.shape_cast %57 : vector<16x1xi32> to vector<16x1xi32>
    %61 = vector.broadcast %60 : vector<16x1xi32> to vector<16x128xi32>
    %62 = arith.select %59, %61, %47 : vector<16x128xi1>, vector<16x128xi32>
    %c31_i32_12 = arith.constant 31 : i32
    %63 = vector.broadcast %c31_i32_12 : i32 to vector<16x1xi32>
    %64 = arith.andi %57, %63 : vector<16x1xi32>
    %c31_i32_13 = arith.constant 31 : i32
    %65 = vector.broadcast %c31_i32_13 : i32 to vector<16x1xi32>
    %66 = arith.subi %65, %64 : vector<16x1xi32>
    %67 = vector.broadcast %66 : vector<16x1xi32> to vector<16x32xi32>
    %68 = arith.cmpi eq, %18, %67 : vector<16x32xi32>
    %c-2147483648_i32_14 = arith.constant -2147483648 : i32
    %69 = vector.broadcast %c-2147483648_i32_14 : i32 to vector<16x32xi32>
    %70 = arith.select %68, %69, %55 : vector<16x32xi1>, vector<16x32xi32>
    %cst_15 = arith.constant dense<-2147483648> : vector<16xi32>
    %71 = vector.multi_reduction <maxsi>, %70, %cst_15 [1] : vector<16x32xi32> to vector<16xi32>
    %72 = vector.shape_cast %71 : vector<16xi32> to vector<16x1xi32>
    %c3_i32 = arith.constant 3 : i32
    %73 = vector.broadcast %c3_i32 : i32 to vector<16x128xi32>
    %74 = arith.cmpi eq, %24, %73 : vector<16x128xi32>
    %75 = vector.shape_cast %72 : vector<16x1xi32> to vector<16x1xi32>
    %76 = vector.broadcast %75 : vector<16x1xi32> to vector<16x128xi32>
    %77 = arith.select %74, %76, %62 : vector<16x128xi1>, vector<16x128xi32>
    %c31_i32_16 = arith.constant 31 : i32
    %78 = vector.broadcast %c31_i32_16 : i32 to vector<16x128xi32>
    %79 = arith.andi %77, %78 : vector<16x128xi32>
    %c31_i32_17 = arith.constant 31 : i32
    %80 = vector.broadcast %c31_i32_17 : i32 to vector<16x128xi32>
    %81 = arith.subi %80, %79 : vector<16x128xi32>
    %c0_i32_18 = arith.constant 0 : i32
    %82 = vector.broadcast %c0_i32_18 : i32 to vector<16x128xi32>
    %83 = arith.cmpi slt, %77, %82 : vector<16x128xi32>
    %c2147483647_i32_19 = arith.constant 2147483647 : i32
    %84 = vector.broadcast %c2147483647_i32_19 : i32 to vector<16x128xi32>
    %85 = arith.xori %77, %84 : vector<16x128xi32>
    %86 = arith.select %83, %85, %77 : vector<16x128xi1>, vector<16x128xi32>
    %87 = tpu.bitcast %86 : vector<16x128xi32> -> vector<16x128xf32>
    %c0_20 = arith.constant 0 : index
    %c0_21 = arith.constant 0 : index
    %88 = vector.load %arg2[%c0_20, %c0_21] : memref<16x128xf32, #tpu.memory_space<vmem>>, vector<16x128xf32>
    tpu.vector_store %arg2[%c0_20, %c0_21], %87 {strides = array<i32>} : memref<16x128xf32, #tpu.memory_space<vmem>>, vector<16x128xf32>,
    %c0_22 = arith.constant 0 : index
    %c0_23 = arith.constant 0 : index
    %89 = vector.load %arg3[%c0_22, %c0_23] : memref<16x128xi32, #tpu.memory_space<vmem>>, vector<16x128xi32>
    tpu.vector_store %arg3[%c0_22, %c0_23], %81 {strides = array<i32>} : memref<16x128xi32, #tpu.memory_space<vmem>>, vector<16x128xi32>,
    return
  }
  func.func @transform_0(%arg0: i32) -> (i32, i32) {
    %c0_i32 = arith.constant 0 : i32
    %c0_i32_0 = arith.constant 0 : i32
    return %arg0, %c0_i32 : i32, i32
  }
  func.func @transform_1(%arg0: i32) -> (i32, i32) {
    %c0_i32 = arith.constant 0 : i32
    %c0_i32_0 = arith.constant 0 : i32
    return %arg0, %c0_i32 : i32, i32
  }
  func.func @transform_2(%arg0: i32) -> (i32, i32) {
    %c0_i32 = arith.constant 0 : i32
    %c0_i32_0 = arith.constant 0 : i32
    return %arg0, %c0_i32 : i32, i32
  }
}

</mosaic_0001>

<llo_original>
// kernel: _decode.1
$region0: #{_decode.1}
  #allocation0 [shape = 'u32[]', space=smem, size = 0x4, offset = 0x4, fixed_abs, tag = 'smem constant byte address 0x4 - core index']
  #allocation1 [shape = 'u32[144,128]{1,0:T(1,128)}', space=vmem, size = 0x12000, scoped, tag = 'internal scratch']
  %s0 = inlined_call_operand.vmem [shape: f32[16,32], index: 0, kind: input, shape index: {}]
  %s1 = inlined_call_operand.vmem [shape: f32[16,128], index: 1, kind: output, shape index: {0}]
  %s2 = inlined_call_operand.vmem [shape: s32[16,128], index: 2, kind: output, shape index: {1}]
  %3 = xla_tuple %s1, %s2
  %s4 = sld [smem:[#allocation0]]
  $region22: #{_decode.1} parent=0
    _
  %s6 = ssub.s32 1, %s4
  %s7 = scalar_select 0, %s6, %s4
  // Predicated region
  $region2: #{_decode.1} parent=0 // pred_check
    _
  $region3: #{_decode.1} parent=0 // pred_check_branch
    %9 = sbr.rel (0) target = $region5
  $region4: #{_decode.1} parent=0 // pred_region
    _
  $region5: #{_decode.1} parent=0 // pred_fallthru
    _
  %v10 = vld [vmem:[%s0] sm:$0xff]
  %v11 = vld [vmem:[%s0 + $0x8] sm:$0xff]
  %vm12 = vcmask 261120
  %v13 = vsel %vm12, %v10, -inf
  %14 = vmax.xlane.f32.xlu0 %v13
  %v15 = vpop.xlane.xlu0 %14
  %v16 = vsel %vm12, %v11, -inf
  %17 = vmax.xlane.f32.xlu0 %v16
  %v18 = vpop.xlane.xlu0 %17
  %v19 = vsub.f32 %v10, %v15
  %v20 = vsub.f32 %v11, %v18
  %v21 = vmul.f32 %v19, 1.442695
  %v22 = vpow.pop %v21
  %v23 = vmul.f32 %v20, 1.442695
  %v24 = vpow.pop %v23
  %v25 = vsel %vm12, %v22, 0.0
  %26 = vadd.xlane.f32.xlu0 %v25
  %v27 = vpop.xlane.xlu0 %26
  %v28 = vsel %vm12, %v24, 0.0
  %29 = vadd.xlane.f32.xlu0 %v28
  %v30 = vpop.xlane.xlu0 %29
  %v31 = vlog2.pop %v27
  %v32 = vmul.f32 %v31, 0.6931472
  %v33 = vlog2.pop %v30
  %v34 = vmul.f32 %v33, 0.6931472
  %v35 = vadd.f32 %v15, %v32
  %v36 = vadd.f32 %v18, %v34
  %v37 = vsub.f32 %v10, %v35
  %v38 = vsub.f32 %v11, %v36
  %vm41 = vcmp.lt.s32.totalorder %v37, 0
  %vm42 = vcmp.lt.s32.totalorder %v38, 0
  %v43 = vxor.u32 %v37, 2147483647
  %v44 = vxor.u32 %v38, 2147483647
  %v45 = vsel %vm41, %v43, %v37
  %v46 = vsel %vm42, %v44, %v38
  %v47 = vlaneseq
  %v48 = vand.u32 %v47, 127
  %v49 = vand.u32 %v45, 4294967264
  %v50 = vand.u32 %v46, 4294967264
  %v51 = vsub.s32 31, %v48
  %v52 = vor.u32 %v49, %v51
  %v53 = vor.u32 %v50, %v51
  %v54 = vsel %vm12, %v52, 2147483648
  %v55 = vand.u32 %v54, 65535
  %v56 = vshra.s32 %v54, 16
  %v57 = vcvt.s32.f32 %v55
  %v58 = vcvt.s32.f32 %v56
  %59 = vmax.xlane.f32.xlu0 %v58
  %v60 = vpop.xlane.xlu0 %59
  %vm61 = vcmp.eq.f32.partialorder %v58, %v60
  %v62 = vsel %vm61, %v57, -inf
  %63 = vmax.xlane.f32.xlu0 %v62
  %v64 = vpop.xlane.xlu0 %63
  %v65 = vcvt.f32.s32 %v64
  %v66 = vcvt.f32.s32 %v60
  %v67 = vshll.u32 %v66, 16
  %v68 = vadd.s32 %v67, %v65
  %v69 = vsel %vm12, %v53, 2147483648
  %v70 = vand.u32 %v69, 65535
  %v71 = vshra.s32 %v69, 16
  %v72 = vcvt.s32.f32 %v70
  %v73 = vcvt.s32.f32 %v71
  %74 = vmax.xlane.f32.xlu0 %v73
  %v75 = vpop.xlane.xlu0 %74
  %vm76 = vcmp.eq.f32.partialorder %v73, %v75
  %v77 = vsel %vm76, %v72, -inf
  %78 = vmax.xlane.f32.xlu0 %v77
  %v79 = vpop.xlane.xlu0 %78
  %v80 = vcvt.f32.s32 %v79
  %v81 = vcvt.f32.s32 %v75
  %v82 = vshll.u32 %v81, 16
  %v83 = vadd.s32 %v82, %v80
  %vm84 = vcmp.eq.s32.totalorder %v48, 0
  %v85 = vsel %vm84, %v68, 0
  %v86 = vsel %vm84, %v83, 0
  %v87 = vand.u32 %v68, 31
  %v88 = vand.u32 %v83, 31
  %v89 = vsub.s32 31, %v87
  %v90 = vsub.s32 31, %v88
  %vm91 = vcmp.eq.s32.totalorder %v48, %v89
  %vm92 = vcmp.eq.s32.totalorder %v48, %v90
  %v93 = vsel %vm91, 2147483648, %v52
  %v94 = vsel %vm92, 2147483648, %v53
  %v95 = vsel %vm12, %v93, 2147483648
  %v96 = vand.u32 %v95, 65535
  %v97 = vshra.s32 %v95, 16
  %v98 = vcvt.s32.f32 %v96
  %v99 = vcvt.s32.f32 %v97
  %100 = vmax.xlane.f32.xlu0 %v99
  %v101 = vpop.xlane.xlu0 %100
  %vm102 = vcmp.eq.f32.partialorder %v99, %v101
  %v103 = vsel %vm102, %v98, -inf
  %104 = vmax.xlane.f32.xlu0 %v103
  %v105 = vpop.xlane.xlu0 %104
  %v106 = vcvt.f32.s32 %v105
  %v107 = vcvt.f32.s32 %v101
  %v108 = vshll.u32 %v107, 16
  %v109 = vadd.s32 %v108, %v106
  %v110 = vsel %vm12, %v94, 2147483648
  %v111 = vand.u32 %v110, 65535
  %v112 = vshra.s32 %v110, 16
  %v113 = vcvt.s32.f32 %v111
  %v114 = vcvt.s32.f32 %v112
  %115 = vmax.xlane.f32.xlu0 %v114
  %v116 = vpop.xlane.xlu0 %115
  %vm117 = vcmp.eq.f32.partialorder %v114, %v116
  %v118 = vsel %vm117, %v113, -inf
  %119 = vmax.xlane.f32.xlu0 %v118
  %v120 = vpop.xlane.xlu0 %119
  %v121 = vcvt.f32.s32 %v120
  %v122 = vcvt.f32.s32 %v116
  %v123 = vshll.u32 %v122, 16
  %v124 = vadd.s32 %v123, %v121
  %vm125 = vcmp.eq.s32.totalorder %v48, 1
  %v126 = vsel %vm125, %v109, %v85
  %v127 = vsel %vm125, %v124, %v86
  %v128 = vand.u32 %v109, 31
  %v129 = vand.u32 %v124, 31
  %v130 = vsub.s32 31, %v128
  %v131 = vsub.s32 31, %v129
  %vm132 = vcmp.eq.s32.totalorder %v48, %v130
  %vm133 = vcmp.eq.s32.totalorder %v48, %v131
  %v134 = vsel %vm132, 2147483648, %v93
  %v135 = vsel %vm133, 2147483648, %v94
  %v136 = vsel %vm12, %v134, 2147483648
  %v137 = vand.u32 %v136, 65535
  %v138 = vshra.s32 %v136, 16
  %v139 = vcvt.s32.f32 %v137
  %v140 = vcvt.s32.f32 %v138
  %141 = vmax.xlane.f32.xlu0 %v140
  %v142 = vpop.xlane.xlu0 %141
  %vm143 = vcmp.eq.f32.partialorder %v140, %v142
  %v144 = vsel %vm143, %v139, -inf
  %145 = vmax.xlane.f32.xlu0 %v144
  %v146 = vpop.xlane.xlu0 %145
  %v147 = vcvt.f32.s32 %v146
  %v148 = vcvt.f32.s32 %v142
  %v149 = vshll.u32 %v148, 16
  %v150 = vadd.s32 %v149, %v147
  %v151 = vsel %vm12, %v135, 2147483648
  %v152 = vand.u32 %v151, 65535
  %v153 = vshra.s32 %v151, 16
  %v154 = vcvt.s32.f32 %v152
  %v155 = vcvt.s32.f32 %v153
  %156 = vmax.xlane.f32.xlu0 %v155
  %v157 = vpop.xlane.xlu0 %156
  %vm158 = vcmp.eq.f32.partialorder %v155, %v157
  %v159 = vsel %vm158, %v154, -inf
  %160 = vmax.xlane.f32.xlu0 %v159
  %v161 = vpop.xlane.xlu0 %160
  %v162 = vcvt.f32.s32 %v161
  %v163 = vcvt.f32.s32 %v157
  %v164 = vshll.u32 %v163, 16
  %v165 = vadd.s32 %v164, %v162
  %vm166 = vcmp.eq.s32.totalorder %v48, 2
  %v167 = vsel %vm166, %v150, %v126
  %v168 = vsel %vm166, %v165, %v127
  %v169 = vand.u32 %v150, 31
  %v170 = vand.u32 %v165, 31
  %v171 = vsub.s32 31, %v169
  %v172 = vsub.s32 31, %v170
  %vm173 = vcmp.eq.s32.totalorder %v48, %v171
  %vm174 = vcmp.eq.s32.totalorder %v48, %v172
  %v175 = vsel %vm173, 2147483648, %v134
  %v176 = vsel %vm174, 2147483648, %v135
  %v177 = vsel %vm12, %v175, 2147483648
  %v178 = vand.u32 %v177, 65535
  %v179 = vshra.s32 %v177, 16
  %v180 = vcvt.s32.f32 %v178
  %v181 = vcvt.s32.f32 %v179
  %182 = vmax.xlane.f32.xlu0 %v181
  %v183 = vpop.xlane.xlu0 %182
  %vm184 = vcmp.eq.f32.partialorder %v181, %v183
  %v185 = vsel %vm184, %v180, -inf
  %186 = vmax.xlane.f32.xlu0 %v185
  %v187 = vpop.xlane.xlu0 %186
  %v188 = vcvt.f32.s32 %v187
  %v189 = vcvt.f32.s32 %v183
  %v190 = vshll.u32 %v189, 16
  %v191 = vadd.s32 %v190, %v188
  %v192 = vsel %vm12, %v176, 2147483648
  %v193 = vand.u32 %v192, 65535
  %v194 = vshra.s32 %v192, 16
  %v195 = vcvt.s32.f32 %v193
  %v196 = vcvt.s32.f32 %v194
  %197 = vmax.xlane.f32.xlu0 %v196
  %v198 = vpop.xlane.xlu0 %197
  %vm199 = vcmp.eq.f32.partialorder %v196, %v198
  %v200 = vsel %vm199, %v195, -inf
  %201 = vmax.xlane.f32.xlu0 %v200
  %v202 = vpop.xlane.xlu0 %201
  %v203 = vcvt.f32.s32 %v202
  %v204 = vcvt.f32.s32 %v198
  %v205 = vshll.u32 %v204, 16
  %v206 = vadd.s32 %v205, %v203
  %vm207 = vcmp.eq.s32.totalorder %v48, 3
  %v208 = vsel %vm207, %v191, %v167
  %v209 = vsel %vm207, %v206, %v168
  %v210 = vand.u32 %v208, 31
  %v211 = vand.u32 %v209, 31
  %v212 = vsub.s32 31, %v210
  %v213 = vsub.s32 31, %v211
  %vm214 = vcmp.lt.s32.totalorder %v208, 0
  %vm215 = vcmp.lt.s32.totalorder %v209, 0
  %v216 = vxor.u32 %v208, 2147483647
  %v217 = vxor.u32 %v209, 2147483647
  %v218 = vsel %vm214, %v216, %v208
  %v219 = vsel %vm215, %v217, %v209
  %222 = vst [vmem:[%s1] sm:$0xff] %v218
  %223 = vst [vmem:[%s1 + $0x8] sm:$0xff] %v219
  %224 = vst [vmem:[%s2] sm:$0xff] %v212
  %225 = vst [vmem:[%s2 + $0x8] sm:$0xff] %v213
  // Predicated region
  $region6: #{_decode.1} parent=0 // pred_check
    _
  $region7: #{_decode.1} parent=0 // pred_check_branch
    %227 = sbr.rel (0) target = $region9
  $region8: #{_decode.1} parent=0 // pred_region
    _
  $region9: #{_decode.1} parent=0 // pred_fallthru
    _
  // Predicated region
  $region10: #{_decode.1} parent=0 // pred_check
    _
  $region11: #{_decode.1} parent=0 // pred_check_branch
    %229 = sbr.rel (0) target = $region13
  $region12: #{_decode.1} parent=0 // pred_region
    _
  $region13: #{_decode.1} parent=0 // pred_fallthru
    _
  // Predicated region
  $region14: #{_decode.1} parent=0 // pred_check
    _
  $region15: #{_decode.1} parent=0 // pred_check_branch
    %231 = sbr.rel (0) target = $region17
  $region16: #{_decode.1} parent=0 // pred_region
    _
  $region17: #{_decode.1} parent=0 // pred_fallthru
    _
  // Predicated region
  $region18: #{_decode.1} parent=0 // pred_check
    _
  $region19: #{_decode.1} parent=0 // pred_check_branch
    %233 = sbr.rel (0) target = $region21
  $region20: #{_decode.1} parent=0 // pred_region
    _
  $region21: #{_decode.1} parent=0 // pred_fallthru
    _

</llo_original>
